<compile_context>
chip_gen: v7x
topology: tpu7x:2x2x1
jax: 0.10.0
libtpu: 0.0.40
codegen_flags: <defaults>
</compile_context>

<pallas_src>
import math

import jax
import jax.numpy as jnp
from jax.experimental import pallas as pl
from jax.experimental.pallas import tpu as pltpu

_LANE = 128
_SUBLANE_32 = 8
_MAX_LANES = 32768            # widest lane-dense slab we search for


# ------------------------- hardware-derived budgets ------------------------- #

def _vmem_capacity_bytes():
    """Per-TensorCore VMEM capacity; conservative (v7x) fallback on failure."""
    try:
        info = pltpu.get_tpu_info()
        cap = int(getattr(info, "vmem_capacity_bytes", 0) or 0)
        if cap > 0:
            return cap
    except Exception:
        pass
    return 64 * 1024 * 1024


_VMEM_CAP = _vmem_capacity_bytes()
# Scoped VMEM limit: <= 48 MiB on v7x (64 MiB physical), ~96 MiB on v5e/v6e.
_VMEM_LIMIT_BYTES = min((_VMEM_CAP * 3) // 4, 100 * 1024 * 1024)
# Tile footprint budget: 4 double-buffered tiles (in + out) plus headroom for
# compiler internal scratch.
_TILE_FOOTPRINT_BUDGET = max(_VMEM_LIMIT_BYTES - 8 * 1024 * 1024, 8 * 1024 * 1024)
_TILE_BYTES_TARGET = 16 * 1024 * 1024     # ~85%+ HBM roofline regime
# Dual-TensorCore (v7x) heuristic: 64 MiB per-TC VMEM -> balanced 2-block split.
_DUAL_TC_LIKELY = _VMEM_CAP <= 64 * 1024 * 1024


# ------------------------------ kernel bodies ------------------------------ #

def _sigmoid1(z):
    # One EUP push per element (tanh) instead of exp + reciprocal.
    return 0.5 * (jnp.tanh(0.5 * z) + 1.0)


def _silu_kernel(x_ref, o_ref):
    x = x_ref[...].astype(jnp.float32)    # f32 compute (required on v5e VPU/EUP)
    o_ref[...] = (x * _sigmoid1(x)).astype(o_ref.dtype)


def _smooth_silu_kernel(inv_s_ref, x_ref, o_ref):
    x = x_ref[...].astype(jnp.float32)
    z = x * inv_s_ref[...]                # inv_s precomputed in f32 -> pure VPU mul
    o_ref[...] = (x * _sigmoid1(z)).astype(o_ref.dtype)


# ------------------------------ tiling helpers ------------------------------ #

def _round_down_to(v, m):
    return max((v // m) * m, m)


def _round_up_to(v, m):
    return ((v + m - 1) // m) * m


def _sublane_multiple(dtype):
    """Dtype-aware sublane packing: 8 for f32, 16 for bf16, 32 for int8/fp8."""
    return max(_SUBLANE_32, 32 // jnp.dtype(dtype).itemsize)


def _pick_row_tile(M, row_bytes, sub):
    """Row tile sized by a byte budget (~10-16 MiB per tile), rounded to the
    dtype's sublane multiple, with a balanced 2-block split on dual-TC chips."""
    per_tile = min(_TILE_BYTES_TARGET, _TILE_FOOTPRINT_BUDGET // 4)
    cap = max(per_tile // max(row_bytes, 1), sub)
    tm = min(cap, M)
    if _DUAL_TC_LIKELY and M > sub:
        # Two near-equal blocks so neither TensorCore idles on a ragged tail.
        half = _round_up_to(pl.cdiv(M, 2), sub)
        tm = min(tm, half)
    if tm >= M:
        return M                          # single block == full array dims
    return _round_down_to(tm, sub)


def _pick_col_tile(L, *, max_lanes=4096):
    """Hidden-axis tile: full width when modest or misaligned, otherwise a
    large multiple of 128 so huge widths stay inside the VMEM budget."""
    if L <= max_lanes or L % _LANE != 0:
        return L
    return max_lanes


def _best_lane_width(total):
    """Widest lane width (multiple of 128, <= _MAX_LANES) dividing `total`."""
    start = min(_MAX_LANES, (total // _LANE) * _LANE)
    for lanes in range(start, _LANE - 1, -_LANE):
        if total % lanes == 0:
            return lanes
    return None


# --------------------------------- wrappers --------------------------------- #

def _run_plain(x2, tm):
    M, L = x2.shape
    return pl.pallas_call(
        _silu_kernel,
        out_shape=jax.ShapeDtypeStruct((M, L), x2.dtype),
        grid=(pl.cdiv(M, tm),),
        in_specs=[pl.BlockSpec((tm, L), lambda i: (i, 0))],
        out_specs=pl.BlockSpec((tm, L), lambda i: (i, 0)),
        compiler_params=pltpu.CompilerParams(
            dimension_semantics=("parallel",),
            vmem_limit_bytes=_VMEM_LIMIT_BYTES),
    )(x2)


def _run_smooth(inv_s2, x2, tm, th):
    M, L = x2.shape
    return pl.pallas_call(
        _smooth_silu_kernel,
        out_shape=jax.ShapeDtypeStruct((M, L), x2.dtype),
        grid=(pl.cdiv(M, tm), pl.cdiv(L, th)),
        in_specs=[
            pl.BlockSpec((1, th), lambda i, j: (0, j)),    # 1/smooth (f32)
            pl.BlockSpec((tm, th), lambda i, j: (i, j)),   # x tile
        ],
        out_specs=pl.BlockSpec((tm, th), lambda i, j: (i, j)),
        compiler_params=pltpu.CompilerParams(
            dimension_semantics=("parallel", "parallel"),
            vmem_limit_bytes=_VMEM_LIMIT_BYTES),
    )(inv_s2, x2)


def quant_silu(x, smooth=None):
    """Pallas TPU implementation of QuantSiLU.forward (use_act_quant=False)."""
    orig_shape = x.shape
    H = orig_shape[-1]
    itemsize = jnp.dtype(x.dtype).itemsize
    sub = _sublane_multiple(x.dtype)

    if smooth is None:
        # Layout-agnostic: flatten to the widest lane-dense slab; pad to a
        # multiple of 128 only if no lane-dense factorization exists.
        total = x.size
        flat = x.reshape(total)
        lanes = _best_lane_width(total)
        padded = False
        if lanes is None:
            padded_total = _round_up_to(total, _LANE)
            flat = jnp.pad(flat, (0, padded_total - total))
            lanes = _best_lane_width(padded_total)
            padded = True
        x2 = flat.reshape(-1, lanes)
        M, L = x2.shape
        tm = _pick_row_tile(M, L * itemsize, sub)
        out = _run_plain(x2, tm)
        out_flat = out.reshape(-1)
        if padded:
            out_flat = out_flat[:total]
        return out_flat.reshape(orig_shape)

    # Smooth path: per-channel scale over the last dim.  Precompute 1/smooth
    # in f32 once (outside the kernel) so the hot loop is a plain multiply.
    s = jnp.asarray(smooth).reshape(-1).astype(jnp.float32)
    inv_s = 1.0 / s
    x2 = x.reshape(-1, H)
    M, L = x2.shape[0], H

    # Lane-densify misaligned hidden sizes: fold k rows into the lane axis
    # (k*H multiple of 128) and repeat smooth k times — per-channel alignment
    # is preserved but stores become full 128-lane vst.
    if H % _LANE != 0:
        k = _LANE // math.gcd(H, _LANE)
        if k > 1 and M % k == 0 and k * H <= _MAX_LANES:
            x2 = x2.reshape(M // k, k * H)
            inv_s = jnp.tile(inv_s, k)
            M, L = M // k, k * H

    inv_s2 = inv_s.reshape(1, L)
    th = _pick_col_tile(L)
    tm = _pick_row_tile(M, th * itemsize, sub)
    out = _run_smooth(inv_s2, x2, tm, th)
    return out.reshape(orig_shape)


# TODO(synk): act_quantizer (use_act_quant=True path) depends on the external
# Quantizer class definition which is not provided; only the default
# use_act_quant=False forward is implemented.  The Hadamard-transform paths of
# the base class H are not invoked by QuantSiLU.forward and are omitted.


if __name__ == "__main__":
    key = jax.random.PRNGKey(0)
    k1, k2, k3 = jax.random.split(key, 3)

    # Small shapes implied by the module: (batch, seq, hidden)
    batch, seq, hidden = 2, 8, 32
    x = jax.random.normal(k1, (batch, seq, hidden), dtype=jnp.float32)
    # Deterministic positive per-channel smooth factor (S_up_gate analogue).
    smooth = 0.5 + jax.nn.sigmoid(jax.random.normal(k2, (hidden,), jnp.float32))

    out_silu = quant_silu(x)                 # smooth is None -> plain SiLU
    out_smooth = quant_silu(x, smooth)       # x * sigmoid(x / smooth)
    jax.block_until_ready((out_silu, out_smooth))

    ref_silu = x * jax.nn.sigmoid(x)
    ref_smooth = x * jax.nn.sigmoid(x / smooth[None, None, :])
    assert jnp.allclose(out_silu, ref_silu, atol=1e-5, rtol=1e-5)
    assert jnp.allclose(out_smooth, ref_smooth, atol=1e-5, rtol=1e-5)

    # Extra check: multi-block grids with ragged last tiles (M not a multiple
    # of the row tile) on both paths, hidden a multiple of 128.
    xr = jax.random.normal(k3, (4, 50, 256), dtype=jnp.float32)
    sr = 0.5 + jax.nn.sigmoid(jnp.arange(256, dtype=jnp.float32) / 256.0)
    out_r1 = quant_silu(xr)
    out_r2 = quant_silu(xr, sr)
    jax.block_until_ready((out_r1, out_r2))
    assert jnp.allclose(out_r1, xr * jax.nn.sigmoid(xr), atol=1e-5, rtol=1e-5)
    assert jnp.allclose(out_r2, xr * jax.nn.sigmoid(xr / sr[None, None, :]),
                        atol=1e-5, rtol=1e-5)

    print("KERNEL_OK")
</pallas_src>

<mosaic_0001>
module attributes {stable_mosaic.version = 11 : i64} {
  func.func @_silu_kernel(%arg0: i32, %arg1: memref<1x512xf32, #tpu.memory_space<vmem>>, %arg2: memref<1x512xf32, #tpu.memory_space<vmem>>) attributes {dimension_semantics = [#tpu.dimension_semantics<parallel>], iteration_bounds = array<i64: 1>, scalar_prefetch = 0 : i64, scratch_operands = 0 : i64, tpu.core_type = #tpu.core_type<tc>, window_params = [{transform_indices = @transform_0, window_bounds = array<i64: 1, 512>}, {transform_indices = @transform_1, window_bounds = array<i64: 1, 512>}]} {
    %c0 = arith.constant 0 : index
    %c0_0 = arith.constant 0 : index
    %0 = vector.load %arg1[%c0, %c0_0] : memref<1x512xf32, #tpu.memory_space<vmem>>, vector<1x512xf32>
    %cst = arith.constant 5.000000e-01 : f32
    %1 = vector.broadcast %cst : f32 to vector<1x512xf32>
    %2 = arith.mulf %1, %0 : vector<1x512xf32>
    %3 = math.tanh %2 : vector<1x512xf32>
    %cst_1 = arith.constant 1.000000e+00 : f32
    %4 = vector.broadcast %cst_1 : f32 to vector<1x512xf32>
    %5 = arith.addf %3, %4 : vector<1x512xf32>
    %cst_2 = arith.constant 5.000000e-01 : f32
    %6 = vector.broadcast %cst_2 : f32 to vector<1x512xf32>
    %7 = arith.mulf %6, %5 : vector<1x512xf32>
    %8 = arith.mulf %0, %7 : vector<1x512xf32>
    %c0_3 = arith.constant 0 : index
    %c0_4 = arith.constant 0 : index
    %9 = vector.load %arg2[%c0_3, %c0_4] : memref<1x512xf32, #tpu.memory_space<vmem>>, vector<1x512xf32>
    tpu.vector_store %arg2[%c0_3, %c0_4], %8 {strides = array<i32>} : memref<1x512xf32, #tpu.memory_space<vmem>>, vector<1x512xf32>,
    return
  }
  func.func @transform_0(%arg0: i32) -> (i32, i32) {
    %c0_i32 = arith.constant 0 : i32
    %c0_i32_0 = arith.constant 0 : i32
    return %arg0, %c0_i32 : i32, i32
  }
  func.func @transform_1(%arg0: i32) -> (i32, i32) {
    %c0_i32 = arith.constant 0 : i32
    %c0_i32_0 = arith.constant 0 : i32
    return %arg0, %c0_i32 : i32, i32
  }
}

</mosaic_0001>

<llo_original>
// kernel: tpu_custom_call.1
$region0: #{tpu_custom_call.1}
  #allocation0 [shape = 'u32[]', space=smem, size = 0x4, offset = 0x4, fixed_abs, tag = 'smem constant byte address 0x4 - core index']
  #allocation1 [shape = 'u32[144,128]{1,0:T(1,128)}', space=vmem, size = 0x12000, scoped, tag = 'internal scratch']
  %s0 = inlined_call_operand.hbm [shape: f32[1,512], index: 0, kind: input, shape index: {}]
  %s1 = inlined_call_operand.hbm [shape: f32[1,512], index: 1, kind: output, shape index: {}]
  %s2 = sld [smem:[#allocation0]]
  $region18: #{tpu_custom_call.1} parent=0
    _
  %s4 = ssub.s32 1, %s2
  %s5 = scalar_select 0, %s4, %s2
  $region1: #{tpu_custom_call.1} parent=0
    #allocation2 [shape = 'u8[2048]{0}', space=vmem, size = 0x800, scoped, tag = 'input window, operand 0, single buffered']
    #allocation3 [shape = 's32[1]{0}', space=sflag, size = 0x4, scoped, tag = 'scoped memory for tpu_custom_call.1']
    #allocation4 [shape = 's32[1]{0}', space=sflag, size = 0x4, scoped, tag = 'scoped memory for tpu_custom_call.1']
    #allocation5 [shape = 'u8[2048]{0}', space=vmem, size = 0x800, scoped, tag = 'output window, operand 0, single buffered']
    %6 = vsyncpa [#allocation3], 0
    %7 = vsyncpa [#allocation4], 0
    // Predicated region
    $region2: #{tpu_custom_call.1} parent=1 // pred_check
      _
    $region3: #{tpu_custom_call.1} parent=1 // pred_check_branch
      %9 = sbr.rel (0) target = $region5
    $region4: #{tpu_custom_call.1} parent=1 // pred_region
      %s11 = ssub.s32 64, 64
      %12 = vsyncadd [#allocation3], %s11
      %s14 = sshll.u32 [#allocation2], 4
      %s15 = int_to_ptr.vmem [resolvable:$true] %s14
      %17 = dma.hbm_to_vmem [thread:$0]  %s0, 64, %s15, [#allocation3]
    $region5: #{tpu_custom_call.1} parent=1 // pred_fallthru
      _
    // Predicated region
    $region6: #{tpu_custom_call.1} parent=1 // pred_check
      _
    $region7: #{tpu_custom_call.1} parent=1 // pred_check_branch
      %19 = sbr.rel (0) target = $region9
    $region8: #{tpu_custom_call.1} parent=1 // pred_region
      %20 = dma.done [#allocation3], 64
    $region9: #{tpu_custom_call.1} parent=1 // pred_fallthru
      _
    %v21 = vld [vmem:[#allocation2] sm:$0xf]
    %v22 = vmul.f32 %v21, 0.5
    %v23 = vtanh.pop %v22
    %v24 = vadd.f32 %v23, 1.0
    %v25 = vmul.f32 %v24, 0.5
    %v26 = vmul.f32 %v21, %v25
    %v27 = vlaneseq
    %vm28 = vcmp.ge.s32.totalorder %v27, 0
    %vm29 = vcmp.lt.s32.totalorder %v27, 512
    %vm30 = vmand %vm28, %vm29
    %31 = vst.msk [vmem:[#allocation5] sm:$0xf] %vm30, %v26
    // Predicated region
    $region10: #{tpu_custom_call.1} parent=1 // pred_check
      _
    $region11: #{tpu_custom_call.1} parent=1 // pred_check_branch
      %33 = sbr.rel (0) target = $region13
    $region12: #{tpu_custom_call.1} parent=1 // pred_region
      %s35 = ssub.s32 64, 64
      %36 = vsyncadd [#allocation4], %s35
      %s38 = sshll.u32 [#allocation5], 4
      %s39 = int_to_ptr.vmem [resolvable:$true] %s38
      %41 = dma.vmem_to_hbm [thread:$0]  %s39, 64, %s1, [#allocation4]
    $region13: #{tpu_custom_call.1} parent=1 // pred_fallthru
      _
    // Predicated region
    $region14: #{tpu_custom_call.1} parent=1 // pred_check
      _
    $region15: #{tpu_custom_call.1} parent=1 // pred_check_branch
      %43 = sbr.rel (0) target = $region17
    $region16: #{tpu_custom_call.1} parent=1 // pred_region
      %44 = dma.done [#allocation4], 64
    $region17: #{tpu_custom_call.1} parent=1 // pred_fallthru
      _
    %45 = vsyncpa [#allocation3], 1
    %46 = vsyncpa [#allocation4], 1

</llo_original>
